<compile_context>
chip_gen: v6e
topology: v6e:2x2x1
jax: 0.10.0
libtpu: 0.0.40
codegen_flags: <defaults>
</compile_context>

<pallas_src>
import jax
import jax.numpy as jnp
from jax.experimental import pallas as pl
from jax.experimental.pallas import tpu as pltpu


def _round_up(x: int, m: int) -> int:
    return (x + m - 1) // m * m


def attention_kernel(q_ref, k_ref, v_ref, m_ref,
                     wqT_ref, bq_ref, wkT_ref, bk_ref, we_ref,
                     o_ref):
    TB, S, E = k_ref.shape
    A = wqT_ref.shape[1]          # padded attention dim (multiple of 128)

    q = q_ref[...]                # (TB, E)
    keys = k_ref[...]             # (TB, S, E)
    values = v_ref[...]           # (TB, S, E)
    mask = m_ref[...]             # (TB, S)   lane-dense

    # ---- Linear projections on the MXU, f32 accumulation ----
    qp = jnp.dot(q, wqT_ref[...],
                 preferred_element_type=jnp.float32) + bq_ref[...]          # (TB, A)
    kp = jnp.dot(keys.reshape(TB * S, E), wkT_ref[...],
                 preferred_element_type=jnp.float32)                        # (TB*S, A)
    kp = kp.reshape(TB, S, A) + bk_ref[...]                                 # (TB, S, A)

    # ---- Additive attention energy (VPU/EUP; no N=1 MXU matmul) ----
    qk = jnp.tanh(qp[:, None, :] + kp)                                      # (TB, S, A)
    scores = jnp.sum(qk * we_ref[...], axis=-1)                             # (TB, S)

    # Mask (matches torch masked_fill(mask == 0, -1e9))
    scores = jnp.where(mask == 0.0, jnp.float32(-1000000000.0), scores)

    # ---- Softmax over the sequence axis (lane axis) ----
    s_max = jnp.max(scores, axis=-1, keepdims=True)                         # (TB, 1)
    e = jnp.exp(scores - s_max)                                             # (TB, S)
    denom = jnp.sum(e, axis=-1, keepdims=True)                              # (TB, 1)
    w = e * pl.reciprocal(denom, approx=True)                               # (TB, S)

    # ---- Weighted sum of values (f32 VPU math; v5e-safe upcast) ----
    ctx = jnp.sum(w[:, :, None] * values.astype(jnp.float32), axis=1)       # (TB, E)
    o_ref[...] = ctx.astype(o_ref.dtype)


def attention_layer(query, keys, values, mask, wq, bq, wk, bk, we,
                    *, block_batch=32, kv_dtype=jnp.float32):
    """query (B,E), keys/values (B,S,E), mask (B,S) or None.
    wq/wk: (A,E) torch-style weights, bq/bk: (A,), we: (1,A).
    kv_dtype: dtype used for the DMA of query/keys/values/W (f32 or bf16);
    all accumulation and VPU/EUP math stays in f32."""
    B, S, E = keys.shape
    A = wq.shape[0]

    if mask is None:
        mask = jnp.ones((B, S), dtype=jnp.float32)

    # ---- layout plumbing (plain JAX) ----
    A_pad = _round_up(A, 128)                         # lane-dense attention dim
    TB = min(_round_up(block_batch, 8), _round_up(B, 8))
    B_pad = _round_up(B, TB)
    pad_b = B_pad - B
    pad_a = A_pad - A

    q_in = jnp.pad(query.astype(kv_dtype), ((0, pad_b), (0, 0)))
    k_in = jnp.pad(keys.astype(kv_dtype), ((0, pad_b), (0, 0), (0, 0)))
    v_in = jnp.pad(values.astype(kv_dtype), ((0, pad_b), (0, 0), (0, 0)))
    m_in = jnp.pad(mask.astype(jnp.float32), ((0, pad_b), (0, 0)),
                   constant_values=1.0)

    # Zero-padding A is inert: tanh(0 + 0) * we_pad(=0) adds 0 to the scores.
    wqT = jnp.pad(wq.T.astype(kv_dtype), ((0, 0), (0, pad_a)))            # (E, A_pad)
    wkT = jnp.pad(wk.T.astype(kv_dtype), ((0, 0), (0, pad_a)))            # (E, A_pad)
    bq2 = jnp.pad(bq.reshape(1, A).astype(jnp.float32), ((0, 0), (0, pad_a)))
    bk2 = jnp.pad(bk.reshape(1, A).astype(jnp.float32), ((0, 0), (0, pad_a)))
    we2 = jnp.pad(we.reshape(1, A).astype(jnp.float32), ((0, 0), (0, pad_a)))

    # TODO(synk): for production shapes with small E, also pad E to 128 lanes
    # and slice the output (VPU lane utilization on the w*V reduction).

    grid = (B_pad // TB,)
    out = pl.pallas_call(
        attention_kernel,
        out_shape=jax.ShapeDtypeStruct((B_pad, E), jnp.float32),
        grid_spec=pltpu.PrefetchScalarGridSpec(
            num_scalar_prefetch=0,
            grid=grid,
            in_specs=[
                pl.BlockSpec((TB, E), lambda b: (b, 0)),        # query
                pl.BlockSpec((TB, S, E), lambda b: (b, 0, 0)),  # keys
                pl.BlockSpec((TB, S, E), lambda b: (b, 0, 0)),  # values
                pl.BlockSpec((TB, S), lambda b: (b, 0)),        # mask (lane-dense)
                pl.BlockSpec((E, A_pad), lambda b: (0, 0)),     # WqT
                pl.BlockSpec((1, A_pad), lambda b: (0, 0)),     # bq
                pl.BlockSpec((E, A_pad), lambda b: (0, 0)),     # WkT
                pl.BlockSpec((1, A_pad), lambda b: (0, 0)),     # bk
                pl.BlockSpec((1, A_pad), lambda b: (0, 0)),     # we (row, not column)
            ],
            out_specs=pl.BlockSpec((TB, E), lambda b: (b, 0)),
        ),
        compiler_params=pltpu.CompilerParams(
            dimension_semantics=("parallel",)),   # batch blocks shard across TCs
    )(q_in, k_in, v_in, m_in, wqT, bq2, wkT, bk2, we2)

    return out[:B]


def reference_attention(query, keys, values, mask, wq, bq, wk, bk, we):
    """Pure-JAX reference mirroring the PyTorch forward."""
    qp = query[:, None, :] @ wq.T + bq          # (B, 1, A)
    kp = keys @ wk.T + bk                       # (B, S, A)
    qk = jnp.tanh(qp + kp)                      # (B, S, A)
    scores = (qk @ we.T)[..., 0]                # (B, S)
    if mask is not None:
        scores = jnp.where(mask == 0, -1000000000.0, scores)
    w = jax.nn.softmax(scores, axis=1)          # (B, S)
    return jnp.einsum("bs,bse->be", w, values)  # (B, E)


def _make_inputs(key, B, S, E, A):
    kq, kk, kv, km, k1, k2, k3, k4, k5 = jax.random.split(key, 9)
    query = jax.random.normal(kq, (B, E), dtype=jnp.float32)
    keys = jax.random.normal(kk, (B, S, E), dtype=jnp.float32)
    values = jax.random.normal(kv, (B, S, E), dtype=jnp.float32)
    mask = (jax.random.uniform(km, (B, S)) > 0.2).astype(jnp.float32)
    mask = mask.at[:, 0].set(1.0)  # at least one valid position per row

    def xavier_normal(k, shape):
        fan_out, fan_in = shape
        std = (2.0 / (fan_in + fan_out)) ** 0.5
        return std * jax.random.normal(k, shape, dtype=jnp.float32)

    wq = xavier_normal(k1, (A, E))
    wk = xavier_normal(k2, (A, E))
    we = xavier_normal(k3, (1, A))
    bq = 0.01 * jax.random.normal(k4, (A,), dtype=jnp.float32)
    bk = 0.01 * jax.random.normal(k5, (A,), dtype=jnp.float32)
    return query, keys, values, mask, wq, bq, wk, bk, we


if __name__ == "__main__":
    key = jax.random.PRNGKey(0)
    k_small, k_big = jax.random.split(key, 2)

    # ---- small shapes, f32 path ----
    B, S, E, A = 2, 8, 32, 64
    args = _make_inputs(k_small, B, S, E, A)

    out = attention_layer(*args)
    out = jax.block_until_ready(out)
    ref = reference_attention(*args)
    assert out.shape == (B, E)
    # approx reciprocal in the softmax normalization + matmul reassociation
    assert jnp.allclose(out, ref, atol=1e-2, rtol=1e-2), "f32 mismatch vs reference"

    # ---- bf16-DMA path (f32 accumulation) vs bf16-rounded-input reference ----
    out_bf16 = attention_layer(*args, kv_dtype=jnp.bfloat16)
    out_bf16 = jax.block_until_ready(out_bf16)
    q_, kk_, vv_, m_, wq_, bq_, wk_, bk_, we_ = args
    ref_bf16 = reference_attention(
        q_.astype(jnp.bfloat16).astype(jnp.float32),
        kk_.astype(jnp.bfloat16).astype(jnp.float32),
        vv_.astype(jnp.bfloat16).astype(jnp.float32),
        m_,
        wq_.astype(jnp.bfloat16).astype(jnp.float32), bq_,
        wk_.astype(jnp.bfloat16).astype(jnp.float32), bk_,
        we_)
    assert jnp.allclose(out_bf16, ref_bf16, atol=1e-2, rtol=1e-2), \
        "bf16 mismatch vs bf16-rounded reference"

    # ---- larger shapes: exercises batch padding and a multi-block grid ----
    B2, S2, E2, A2 = 20, 16, 64, 64
    args2 = _make_inputs(k_big, B2, S2, E2, A2)
    out2 = attention_layer(*args2, block_batch=8)      # TB=8, B_pad=24, grid=(3,)
    out2 = jax.block_until_ready(out2)
    ref2 = reference_attention(*args2)
    assert out2.shape == (B2, E2)
    assert jnp.allclose(out2, ref2, atol=1e-2, rtol=1e-2), "multi-block mismatch"

    print("KERNEL_OK")
</pallas_src>

<mosaic_0001>
module attributes {stable_mosaic.version = 11 : i64} {
  func.func @attention_kernel(%arg0: i32, %arg1: memref<8x32xf32, #tpu.memory_space<vmem>>, %arg2: memref<8x8x32xf32, #tpu.memory_space<vmem>>, %arg3: memref<8x8x32xf32, #tpu.memory_space<vmem>>, %arg4: memref<8x8xf32, #tpu.memory_space<vmem>>, %arg5: memref<32x128xf32, #tpu.memory_space<vmem>>, %arg6: memref<1x128xf32, #tpu.memory_space<vmem>>, %arg7: memref<32x128xf32, #tpu.memory_space<vmem>>, %arg8: memref<1x128xf32, #tpu.memory_space<vmem>>, %arg9: memref<1x128xf32, #tpu.memory_space<vmem>>, %arg10: memref<8x32xf32, #tpu.memory_space<vmem>>) attributes {dimension_semantics = [#tpu.dimension_semantics<parallel>], iteration_bounds = array<i64: 1>, scalar_prefetch = 0 : i64, scratch_operands = 0 : i64, tpu.core_type = #tpu.core_type<tc>, window_params = [{transform_indices = @transform_0, window_bounds = array<i64: 8, 32>}, {transform_indices = @transform_1, window_bounds = array<i64: 8, 8, 32>}, {transform_indices = @transform_2, window_bounds = array<i64: 8, 8, 32>}, {transform_indices = @transform_3, window_bounds = array<i64: 8, 8>}, {pipeline_mode = #tpu.pipeline_mode<synchronous>, transform_indices = @transform_4, window_bounds = array<i64: 32, 128>}, {pipeline_mode = #tpu.pipeline_mode<synchronous>, transform_indices = @transform_5, window_bounds = array<i64: 1, 128>}, {pipeline_mode = #tpu.pipeline_mode<synchronous>, transform_indices = @transform_6, window_bounds = array<i64: 32, 128>}, {pipeline_mode = #tpu.pipeline_mode<synchronous>, transform_indices = @transform_7, window_bounds = array<i64: 1, 128>}, {pipeline_mode = #tpu.pipeline_mode<synchronous>, transform_indices = @transform_8, window_bounds = array<i64: 1, 128>}, {transform_indices = @transform_9, window_bounds = array<i64: 8, 32>}]} {
    %c0 = arith.constant 0 : index
    %c0_0 = arith.constant 0 : index
    %0 = vector.load %arg1[%c0, %c0_0] : memref<8x32xf32, #tpu.memory_space<vmem>>, vector<8x32xf32>
    %c0_1 = arith.constant 0 : index
    %c0_2 = arith.constant 0 : index
    %c0_3 = arith.constant 0 : index
    %1 = vector.load %arg2[%c0_1, %c0_2, %c0_3] : memref<8x8x32xf32, #tpu.memory_space<vmem>>, vector<8x8x32xf32>
    %c0_4 = arith.constant 0 : index
    %c0_5 = arith.constant 0 : index
    %c0_6 = arith.constant 0 : index
    %2 = vector.load %arg3[%c0_4, %c0_5, %c0_6] : memref<8x8x32xf32, #tpu.memory_space<vmem>>, vector<8x8x32xf32>
    %c0_7 = arith.constant 0 : index
    %c0_8 = arith.constant 0 : index
    %3 = vector.load %arg4[%c0_7, %c0_8] : memref<8x8xf32, #tpu.memory_space<vmem>>, vector<8x8xf32>
    %c0_9 = arith.constant 0 : index
    %c0_10 = arith.constant 0 : index
    %4 = vector.load %arg5[%c0_9, %c0_10] : memref<32x128xf32, #tpu.memory_space<vmem>>, vector<32x128xf32>
    %cst = arith.constant dense<0.000000e+00> : vector<8x128xf32>
    %5 = tpu.matmul %0, %4, %cst {dimension_numbers = #tpu.dot_dimension_numbers<[1], [0], [0], [1], [0, 0, 1, 1], [], []>} : vector<8x32xf32>, vector<32x128xf32>, vector<8x128xf32> -> vector<8x128xf32>
    %c0_11 = arith.constant 0 : index
    %c0_12 = arith.constant 0 : index
    %6 = vector.load %arg6[%c0_11, %c0_12] : memref<1x128xf32, #tpu.memory_space<vmem>>, vector<1x128xf32>
    %7 = vector.broadcast %6 : vector<1x128xf32> to vector<8x128xf32>
    %8 = arith.addf %5, %7 : vector<8x128xf32>
    %9 = vector.shape_cast %1 : vector<8x8x32xf32> to vector<64x32xf32>
    %c0_13 = arith.constant 0 : index
    %c0_14 = arith.constant 0 : index
    %10 = vector.load %arg7[%c0_13, %c0_14] : memref<32x128xf32, #tpu.memory_space<vmem>>, vector<32x128xf32>
    %cst_15 = arith.constant dense<0.000000e+00> : vector<64x128xf32>
    %11 = tpu.matmul %9, %10, %cst_15 {dimension_numbers = #tpu.dot_dimension_numbers<[1], [0], [0], [1], [0, 0, 1, 1], [], []>} : vector<64x32xf32>, vector<32x128xf32>, vector<64x128xf32> -> vector<64x128xf32>
    %12 = vector.shape_cast %11 : vector<64x128xf32> to vector<8x8x128xf32>
    %c0_16 = arith.constant 0 : index
    %c0_17 = arith.constant 0 : index
    %13 = vector.load %arg8[%c0_16, %c0_17] : memref<1x128xf32, #tpu.memory_space<vmem>>, vector<1x128xf32>
    %14 = vector.shape_cast %13 : vector<1x128xf32> to vector<1x1x128xf32>
    %15 = vector.broadcast %14 : vector<1x1x128xf32> to vector<8x8x128xf32>
    %16 = arith.addf %12, %15 : vector<8x8x128xf32>
    %17 = vector.shape_cast %8 : vector<8x128xf32> to vector<8x1x128xf32>
    %18 = vector.broadcast %17 : vector<8x1x128xf32> to vector<8x8x128xf32>
    %19 = arith.addf %18, %16 : vector<8x8x128xf32>
    %20 = math.tanh %19 : vector<8x8x128xf32>
    %c0_18 = arith.constant 0 : index
    %c0_19 = arith.constant 0 : index
    %21 = vector.load %arg9[%c0_18, %c0_19] : memref<1x128xf32, #tpu.memory_space<vmem>>, vector<1x128xf32>
    %22 = vector.shape_cast %21 : vector<1x128xf32> to vector<1x1x128xf32>
    %23 = vector.broadcast %22 : vector<1x1x128xf32> to vector<8x8x128xf32>
    %24 = arith.mulf %20, %23 : vector<8x8x128xf32>
    %cst_20 = arith.constant dense<0.000000e+00> : vector<8x8xf32>
    %25 = vector.multi_reduction <add>, %24, %cst_20 [2] : vector<8x8x128xf32> to vector<8x8xf32>
    %cst_21 = arith.constant 0.000000e+00 : f32
    %26 = vector.broadcast %cst_21 : f32 to vector<8x8xf32>
    %27 = arith.cmpf oeq, %3, %26 : vector<8x8xf32>
    %cst_22 = arith.constant -1.000000e+09 : f32
    %28 = vector.broadcast %cst_22 : f32 to vector<8x8xf32>
    %29 = arith.select %27, %28, %25 : vector<8x8xi1>, vector<8x8xf32>
    %cst_23 = arith.constant dense<0xFF800000> : vector<8xf32>
    %30 = vector.multi_reduction <maximumf>, %29, %cst_23 [1] : vector<8x8xf32> to vector<8xf32>
    %31 = vector.shape_cast %30 : vector<8xf32> to vector<8x1xf32>
    %32 = vector.broadcast %31 : vector<8x1xf32> to vector<8x8xf32>
    %33 = arith.subf %29, %32 : vector<8x8xf32>
    %34 = math.exp %33 : vector<8x8xf32>
    %cst_24 = arith.constant dense<0.000000e+00> : vector<8xf32>
    %35 = vector.multi_reduction <add>, %34, %cst_24 [1] : vector<8x8xf32> to vector<8xf32>
    %36 = vector.shape_cast %35 : vector<8xf32> to vector<8x1xf32>
    %37 = tpu.reciprocal %36 {approx = true} : vector<8x1xf32> -> vector<8x1xf32>
    %38 = vector.broadcast %37 : vector<8x1xf32> to vector<8x8xf32>
    %39 = arith.mulf %34, %38 : vector<8x8xf32>
    %40 = vector.shape_cast %39 : vector<8x8xf32> to vector<8x8x1xf32>
    %41 = vector.broadcast %40 : vector<8x8x1xf32> to vector<8x8x32xf32>
    %42 = arith.mulf %41, %2 : vector<8x8x32xf32>
    %cst_25 = arith.constant dense<0.000000e+00> : vector<8x32xf32>
    %43 = vector.multi_reduction <add>, %42, %cst_25 [1] : vector<8x8x32xf32> to vector<8x32xf32>
    %c0_26 = arith.constant 0 : index
    %c0_27 = arith.constant 0 : index
    %44 = vector.load %arg10[%c0_26, %c0_27] : memref<8x32xf32, #tpu.memory_space<vmem>>, vector<8x32xf32>
    tpu.vector_store %arg10[%c0_26, %c0_27], %43 {strides = array<i32>} : memref<8x32xf32, #tpu.memory_space<vmem>>, vector<8x32xf32>,
    return
  }
  func.func @transform_0(%arg0: i32) -> (i32, i32) {
    %c0_i32 = arith.constant 0 : i32
    %c0_i32_0 = arith.constant 0 : i32
    return %arg0, %c0_i32 : i32, i32
  }
  func.func @transform_1(%arg0: i32) -> (i32, i32, i32) {
    %c0_i32 = arith.constant 0 : i32
    %c0_i32_0 = arith.constant 0 : i32
    %c0_i32_1 = arith.constant 0 : i32
    return %arg0, %c0_i32, %c0_i32_0 : i32, i32, i32
  }
  func.func @transform_2(%arg0: i32) -> (i32, i32, i32) {
    %c0_i32 = arith.constant 0 : i32
    %c0_i32_0 = arith.constant 0 : i32
    %c0_i32_1 = arith.constant 0 : i32
    return %arg0, %c0_i32, %c0_i32_0 : i32, i32, i32
  }
  func.func @transform_3(%arg0: i32) -> (i32, i32) {
    %c0_i32 = arith.constant 0 : i32
    %c0_i32_0 = arith.constant 0 : i32
    return %arg0, %c0_i32 : i32, i32
  }
  func.func @transform_4(%arg0: i32) -> (i32, i32) {
    %c0_i32 = arith.constant 0 : i32
    %c0_i32_0 = arith.constant 0 : i32
    %c0_i32_1 = arith.constant 0 : i32
    return %c0_i32, %c0_i32_0 : i32, i32
  }
  func.func @transform_5(%arg0: i32) -> (i32, i32) {
    %c0_i32 = arith.constant 0 : i32
    %c0_i32_0 = arith.constant 0 : i32
    %c0_i32_1 = arith.constant 0 : i32
    return %c0_i32, %c0_i32_0 : i32, i32
  }
  func.func @transform_6(%arg0: i32) -> (i32, i32) {
    %c0_i32 = arith.constant 0 : i32
    %c0_i32_0 = arith.constant 0 : i32
    %c0_i32_1 = arith.constant 0 : i32
    return %c0_i32, %c0_i32_0 : i32, i32
  }
  func.func @transform_7(%arg0: i32) -> (i32, i32) {
    %c0_i32 = arith.constant 0 : i32
    %c0_i32_0 = arith.constant 0 : i32
    %c0_i32_1 = arith.constant 0 : i32
    return %c0_i32, %c0_i32_0 : i32, i32
  }
  func.func @transform_8(%arg0: i32) -> (i32, i32) {
    %c0_i32 = arith.constant 0 : i32
    %c0_i32_0 = arith.constant 0 : i32
    %c0_i32_1 = arith.constant 0 : i32
    return %c0_i32, %c0_i32_0 : i32, i32
  }
  func.func @transform_9(%arg0: i32) -> (i32, i32) {
    %c0_i32 = arith.constant 0 : i32
    %c0_i32_0 = arith.constant 0 : i32
    return %arg0, %c0_i32 : i32, i32
  }
}

</mosaic_0001>

<llo_original>
// kernel: tpu_custom_call.1
$region0: #{tpu_custom_call.1}
  #allocation0 [shape = 'u32[]', space=smem, size = 0x4, offset = 0x4, fixed_abs, tag = 'smem constant byte address 0x4 - core index']
  #allocation1 [shape = 'u32[144,128]{1,0:T(1,128)}', space=vmem, size = 0x12000, scoped, tag = 'internal scratch']
  %s0 = inlined_call_operand.hbm [shape: f32[8,32], index: 0, kind: input, shape index: {}]
  %s1 = inlined_call_operand.hbm [shape: f32[8,8,32], index: 1, kind: input, shape index: {}]
  %s2 = inlined_call_operand.hbm [shape: f32[8,8,32], index: 2, kind: input, shape index: {}]
  %s3 = inlined_call_operand.hbm [shape: f32[8,8], index: 3, kind: input, shape index: {}]
  %s4 = inlined_call_operand.hbm [shape: f32[32,128], index: 4, kind: input, shape index: {}]
  %s5 = inlined_call_operand.vmem [shape: f32[1,128], index: 5, kind: input, shape index: {}]
  %s6 = inlined_call_operand.hbm [shape: f32[32,128], index: 6, kind: input, shape index: {}]
  %s7 = inlined_call_operand.vmem [shape: f32[1,128], index: 7, kind: input, shape index: {}]
  %s8 = inlined_call_operand.vmem [shape: f32[1,128], index: 8, kind: input, shape index: {}]
  %s9 = inlined_call_operand.hbm [shape: f32[8,32], index: 9, kind: output, shape index: {}]
  %s10 = sld [smem:[#allocation0]]
  $region70: #{tpu_custom_call.1} parent=0
    _
  %s12 = ssub.s32 1, %s10
  %s13 = scalar_select 0, %s12, %s10
  $region1: #{tpu_custom_call.1} parent=0
    #allocation2 [shape = 'u8[4096]{0}', space=vmem, size = 0x1000, scoped, tag = 'input window, operand 0, single buffered']
    #allocation3 [shape = 's32[1]{0}', space=sflag, size = 0x4, scoped, tag = 'scoped memory for tpu_custom_call.1']
    #allocation4 [shape = 's32[1]{0}', space=sflag, size = 0x4, scoped, tag = 'scoped memory for tpu_custom_call.1']
    #allocation5 [shape = 'u8[32768]{0}', space=vmem, size = 0x8000, scoped, tag = 'input window, operand 1, single buffered']
    #allocation6 [shape = 's32[1]{0}', space=sflag, size = 0x4, scoped, tag = 'scoped memory for tpu_custom_call.1']
    #allocation7 [shape = 'u8[32768]{0}', space=vmem, size = 0x8000, scoped, tag = 'input window, operand 2, single buffered']
    #allocation8 [shape = 'u8[4096]{0}', space=vmem, size = 0x1000, scoped, tag = 'input window, operand 3, single buffered']
    #allocation9 [shape = 's32[1]{0}', space=sflag, size = 0x4, scoped, tag = 'scoped memory for tpu_custom_call.1']
    #allocation10 [shape = 'u8[16384]{0}', space=vmem, size = 0x4000, scoped, tag = 'input window, operand 4, single buffered']
    #allocation11 [shape = 'u8[16384]{0}', space=vmem, size = 0x4000, scoped, tag = 'input window, operand 6, single buffered']
    #allocation12 [shape = 's32[1]{0}', space=sflag, size = 0x4, scoped, tag = 'scoped memory for tpu_custom_call.1']
    #allocation13 [shape = 'u8[4096]{0}', space=vmem, size = 0x1000, scoped, tag = 'output window, operand 0, single buffered']
    %14 = vsyncpa [#allocation3], 0
    %15 = vsyncpa [#allocation6], 0
    %16 = vsyncpa [#allocation9], 0
    %17 = vsyncpa [#allocation12], 0
    %18 = vsyncpa [#allocation4], 0
    // Predicated region
    $region2: #{tpu_custom_call.1} parent=1 // pred_check
      _
    $region3: #{tpu_custom_call.1} parent=1 // pred_check_branch
      %20 = sbr.rel (0) target = $region5
    $region4: #{tpu_custom_call.1} parent=1 // pred_region
      %s22 = ssub.s32 128, 128
      %23 = vsyncadd [#allocation3], %s22
      %s25 = sshll.u32 [#allocation2], 4
      %s26 = int_to_ptr.vmem [resolvable:$true] %s25
      %28 = dma.hbm_to_vmem [thread:$0]  %s0, 128, %s26, [#allocation3]
    $region5: #{tpu_custom_call.1} parent=1 // pred_fallthru
      _
    // Predicated region
    $region6: #{tpu_custom_call.1} parent=1 // pred_check
      _
    $region7: #{tpu_custom_call.1} parent=1 // pred_check_branch
      %30 = sbr.rel (0) target = $region9
    $region8: #{tpu_custom_call.1} parent=1 // pred_region
      %s32 = ssub.s32 1024, 1024
      %33 = vsyncadd [#allocation6], %s32
      %s34 = sshll.u32 [#allocation5], 4
      %s35 = int_to_ptr.vmem [resolvable:$true] %s34
      %40 = dma.hbm_to_vmem [thread:$0]  %s1, 1024, %s35, [#allocation6], 128, 128, 8
    $region9: #{tpu_custom_call.1} parent=1 // pred_fallthru
      _
    // Predicated region
    $region10: #{tpu_custom_call.1} parent=1 // pred_check
      _
    $region11: #{tpu_custom_call.1} parent=1 // pred_check_branch
      %42 = sbr.rel (0) target = $region13
    $region12: #{tpu_custom_call.1} parent=1 // pred_region
      %s44 = ssub.s32 1024, 1024
      %45 = vsyncadd [#allocation6], %s44
      %s46 = sshll.u32 [#allocation7], 4
      %s47 = int_to_ptr.vmem [resolvable:$true] %s46
      %52 = dma.hbm_to_vmem [thread:$0]  %s2, 1024, %s47, [#allocation6], 128, 128, 8
    $region13: #{tpu_custom_call.1} parent=1 // pred_fallthru
      _
    // Predicated region
    $region14: #{tpu_custom_call.1} parent=1 // pred_check
      _
    $region15: #{tpu_custom_call.1} parent=1 // pred_check_branch
      %54 = sbr.rel (0) target = $region17
    $region16: #{tpu_custom_call.1} parent=1 // pred_region
      %s56 = ssub.s32 128, 128
      %57 = vsyncadd [#allocation9], %s56
      %s59 = sshll.u32 [#allocation8], 4
      %s60 = int_to_ptr.vmem [resolvable:$true] %s59
      %62 = dma.hbm_to_vmem [thread:$0]  %s3, 128, %s60, [#allocation9]
    $region17: #{tpu_custom_call.1} parent=1 // pred_fallthru
      _
    // Predicated region
    $region18: #{tpu_custom_call.1} parent=1 // pred_check
      _
    $region19: #{tpu_custom_call.1} parent=1 // pred_check_branch
      %64 = sbr.rel (0) target = $region21
    $region20: #{tpu_custom_call.1} parent=1 // pred_region
      %s66 = ssub.s32 512, 512
      %67 = vsyncadd [#allocation9], %s66
      %s68 = sshll.u32 [#allocation10], 4
      %s69 = int_to_ptr.vmem [resolvable:$true] %s68
      %74 = dma.hbm_to_vmem [thread:$0]  %s4, 512, %s69, [#allocation9], 128, 128, 8
    $region21: #{tpu_custom_call.1} parent=1 // pred_fallthru
      _
    // Predicated region
    $region22: #{tpu_custom_call.1} parent=1 // pred_check
      _
    $region23: #{tpu_custom_call.1} parent=1 // pred_check_branch
      %76 = sbr.rel (0) target = $region25
    $region24: #{tpu_custom_call.1} parent=1 // pred_region
      _
    $region25: #{tpu_custom_call.1} parent=1 // pred_fallthru
      _
    // Predicated region
    $region26: #{tpu_custom_call.1} parent=1 // pred_check
      _
    $region27: #{tpu_custom_call.1} parent=1 // pred_check_branch
      %78 = sbr.rel (0) target = $region29
    $region28: #{tpu_custom_call.1} parent=1 // pred_region
      %s80 = ssub.s32 512, 512
      %81 = vsyncadd [#allocation12], %s80
      %s82 = sshll.u32 [#allocation11], 4
      %s83 = int_to_ptr.vmem [resolvable:$true] %s82
      %88 = dma.hbm_to_vmem [thread:$0]  %s6, 512, %s83, [#allocation12], 128, 128, 8
    $region29: #{tpu_custom_call.1} parent=1 // pred_fallthru
      _
    // Predicated region
    $region30: #{tpu_custom_call.1} parent=1 // pred_check
      _
    $region31: #{tpu_custom_call.1} parent=1 // pred_check_branch
      %90 = sbr.rel (0) target = $region33
    $region32: #{tpu_custom_call.1} parent=1 // pred_region
      _
    $region33: #{tpu_custom_call.1} parent=1 // pred_fallthru
      _
    // Predicated region
    $region34: #{tpu_custom_call.1} parent=1 // pred_check
      _
    $region35: #{tpu_custom_call.1} parent=1 // pred_check_branch
      %92 = sbr.rel (0) target = $region37
    $region36: #{tpu_custom_call.1} parent=1 // pred_region
      _
    $region37: #{tpu_custom_call.1} parent=1 // pred_fallthru
      _
    // Predicated region
    $region38: #{tpu_custom_call.1} parent=1 // pred_check
      _
    $region39: #{tpu_custom_call.1} parent=1 // pred_check_branch
      %94 = sbr.rel (0) target = $region41
    $region40: #{tpu_custom_call.1} parent=1 // pred_region
      %95 = dma.done [#allocation3], 128
    $region41: #{tpu_custom_call.1} parent=1 // pred_fallthru
      _
    // Predicated region
    $region42: #{tpu_custom_call.1} parent=1 // pred_check
      _
    $region43: #{tpu_custom_call.1} parent=1 // pred_check_branch
      %97 = sbr.rel (0) target = $region45
    $region44: #{tpu_custom_call.1} parent=1 // pred_region
      %98 = dma.done [#allocation6], 1024
    $region45: #{tpu_custom_call.1} parent=1 // pred_fallthru
      _
    // Predicated region
    $region46: #{tpu_custom_call.1} parent=1 // pred_check
      _
    $region47: #{tpu_custom_call.1} parent=1 // pred_check_branch
      %100 = sbr.rel (0) target = $region49
    $region48: #{tpu_custom_call.1} parent=1 // pred_region
      %101 = dma.done [#allocation6], 1024
    $region49: #{tpu_custom_call.1} parent=1 // pred_fallthru
      _
    // Predicated region
    $region50: #{tpu_custom_call.1} parent=1 // pred_check
      _
    $region51: #{tpu_custom_call.1} parent=1 // pred_check_branch
      %103 = sbr.rel (0) target = $region53
    $region52: #{tpu_custom_call.1} parent=1 // pred_region
      %104 = dma.done [#allocation9], 128
    $region53: #{tpu_custom_call.1} parent=1 // pred_fallthru
      _
    // Predicated region
    $region54: #{tpu_custom_call.1} parent=1 // pred_check
      _
    $region55: #{tpu_custom_call.1} parent=1 // pred_check_branch
      %106 = sbr.rel (0) target = $region57
    $region56: #{tpu_custom_call.1} parent=1 // pred_region
      %107 = dma.done [#allocation9], 512
    $region57: #{tpu_custom_call.1} parent=1 // pred_fallthru
      _
    // Predicated region
    $region58: #{tpu_custom_call.1} parent=1 // pred_check
      _
    $region59: #{tpu_custom_call.1} parent=1 // pred_check_branch
      %109 = sbr.rel (0) target = $region61
    $region60: #{tpu_custom_call.1} parent=1 // pred_region
      %110 = dma.done [#allocation12], 512
    $region61: #{tpu_custom_call.1} parent=1 // pred_fallthru
      _
    %v111 = vld [vmem:[#allocation2] sm:$0xff]
    %v112 = vld [vmem:[#allocation5] sm:$0xff]
    %v113 = vld [vmem:[#allocation5 + $0x8] sm:$0xff]
    %v114 = vld [vmem:[#allocation5 + $0x10] sm:$0xff]
    %v115 = vld [vmem:[#allocation5 + $0x18] sm:$0xff]
    %v116 = vld [vmem:[#allocation5 + $0x20] sm:$0xff]
    %v117 = vld [vmem:[#allocation5 + $0x28] sm:$0xff]
    %v118 = vld [vmem:[#allocation5 + $0x30] sm:$0xff]
    %v119 = vld [vmem:[#allocation5 + $0x38] sm:$0xff]
    %v120 = vld [vmem:[#allocation7] sm:$0xff]
    %v121 = vld [vmem:[#allocation7 + $0x8] sm:$0xff]
    %v122 = vld [vmem:[#allocation7 + $0x10] sm:$0xff]
    %v123 = vld [vmem:[#allocation7 + $0x18] sm:$0xff]
    %v124 = vld [vmem:[#allocation7 + $0x20] sm:$0xff]
    %v125 = vld [vmem:[#allocation7 + $0x28] sm:$0xff]
    %v126 = vld [vmem:[#allocation7 + $0x30] sm:$0xff]
    %v127 = vld [vmem:[#allocation7 + $0x38] sm:$0xff]
    %v128 = vld [vmem:[#allocation8] sm:$0xff]
    %v129 = vld [vmem:[#allocation10] sm:$0xff]
    %v130 = vld [vmem:[#allocation10 + $0x8] sm:$0xff]
    %v131 = vld [vmem:[#allocation10 + $0x10] sm:$0xff]
    %v132 = vld [vmem:[#allocation10 + $0x18] sm:$0xff]
    %v133 = vld [vmem:[%s5] sm:$0x1]
    %v135 = vlaneseq
    %v136 = vshrl.u32 %v135, 7
    %v137 = vsub.s32 0, %v136
    %v138 = vrot.slane %v133, %v137
    %vm140 = vcmask 261120
    %v142 = vsel %vm140, %v111, 0
    %144 = vmatprep.subr.mxu0 0.0
    %145 = vmatpush1.msra.mxu0 0.0
    %146 = vmatprep.subr.mxu0 0.0
    %147 = vmatpush1.msra.mxu0 0.0
    %148 = vmatprep.subr.mxu0 0.0
    %149 = vmatpush1.msra.mxu0 0.0
    %150 = vmatprep.subr.mxu0 0.0
    %151 = vmatpush1.msra.mxu0 0.0
    %152 = vmatprep.subr.mxu0 0.0
    %153 = vmatpush1.msra.mxu0 0.0
    %154 = vmatprep.subr.mxu0 0.0
    %155 = vmatpush1.msra.mxu0 0.0
    %156 = vmatprep.subr.mxu0 0.0
    %157 = vmatpush1.msra.mxu0 0.0
    %158 = vmatprep.subr.mxu0 0.0
    %159 = vmatpush1.msra.mxu0 0.0
    %160 = vmatprep.subr.mxu0 0.0
    %161 = vmatpush1.msra.mxu0 0.0
    %162 = vmatprep.subr.mxu0 0.0
    %163 = vmatpush1.msra.mxu0 0.0
    %164 = vmatprep.subr.mxu0 0.0
    %165 = vmatpush1.msra.mxu0 0.0
    %166 = vmatprep.subr.mxu0 0.0
    %167 = vmatpush1.msra.mxu0 0.0
    %168 = vmatprep.subr.mxu0 0.0
    %169 = vmatpush1.msra.mxu0 %v132
    %170 = vmatprep.subr.mxu0 0.0
    %171 = vmatpush1.msra.mxu0 %v131
    %172 = vmatprep.subr.mxu0 0.0
    %173 = vmatpush1.msra.mxu0 %v130
    %174 = vmatprep.subr.mxu0 0.0
    %175 = vmatpush1.msra.mxu0 %v129
    %176 = vmatprep.subr.mxu0 0.0
    %177 = vmatpush2.msra.mxu0 0.0
    %178 = vmatprep.subr.mxu0 0.0
    %179 = vmatpush2.msra.mxu0 0.0
    %180 = vmatprep.subr.mxu0 0.0
    %181 = vmatpush2.msra.mxu0 0.0
    %182 = vmatprep.subr.mxu0 0.0
    %183 = vmatpush2.msra.mxu0 0.0
    %184 = vmatprep.subr.mxu0 0.0
    %185 = vmatpush2.msra.mxu0 0.0
    %186 = vmatprep.subr.mxu0 0.0
    %187 = vmatpush2.msra.mxu0 0.0
    %188 = vmatprep.subr.mxu0 0.0
    %189 = vmatpush2.msra.mxu0 0.0
    %190 = vmatprep.subr.mxu0 0.0
    %191 = vmatpush2.msra.mxu0 0.0
    %192 = vmatprep.subr.mxu0 0.0
    %193 = vmatpush2.msra.mxu0 0.0
    %194 = vmatprep.subr.mxu0 0.0
    %195 = vmatpush2.msra.mxu0 0.0
    %196 = vmatprep.subr.mxu0 0.0
    %197 = vmatpush2.msra.mxu0 0.0
    %198 = vmatprep.subr.mxu0 0.0
    %199 = vmatpush2.msra.mxu0 0.0
    %200 = vmatprep.subr.mxu0 0.0
    %201 = vmatpush2.msra.mxu0 0.0
    %202 = vmatprep.subr.mxu0 0.0
    %203 = vmatpush2.msra.mxu0 0.0
    %204 = vmatprep.subr.mxu0 0.0
    %205 = vmatpush2.msra.mxu0 0.0
    %206 = vmatprep.subr.mxu0 0.0
    %207 = vmatpush2.msra.mxu0 0.0
    %208 = vmatprep.mubr.f32.mxu0 0.0
    %209 = vmatmul.mubr.f32.gmra.mxu0 %v142
    %v210 = vpop.f32.mrf.mxu0
    %v211 = vadd.f32 %v138, %v210
    %v212 = vpop.f32.mrf.mxu0
    %213 = vdwg.mxu0
    %v214 = vld [vmem:[#allocation11] sm:$0xff]
    %v215 = vld [vmem:[#allocation11 + $0x8] sm:$0xff]
    %v216 = vld [vmem:[#allocation11 + $0x10] sm:$0xff]
    %v217 = vld [vmem:[#allocation11 + $0x18] sm:$0xff]
    %v219 = vsel %vm140, %v112, 0
    %v222 = vsel %vm140, %v113, 0
    %v225 = vsel %vm140, %v114, 0
    %v228 = vsel %vm140, %v115, 0
    %v231 = vsel %vm140, %v116, 0
    %v234 = vsel %vm140, %v117, 0
    %v237 = vsel %vm140, %v118, 0
    %v240 = vsel %vm140, %v119, 0
    %242 = vmatprep.subr.mxu0 0.0
    %243 = vmatpush1.msra.mxu0 0.0
    %244 = vmatprep.subr.mxu0 0.0
    %245 = vmatpush1.msra.mxu0 0.0
    %246 = vmatprep.subr.mxu0 0.0
    %247 = vmatpush1.msra.mxu0 0.0
    %248 = vmatprep.subr.mxu0 0.0
    %249 = vmatpush1.msra.mxu0 0.0
    %250 = vmatprep.subr.mxu0 0.0
    %251 = vmatpush1.msra.mxu0 0.0
    %252 = vmatprep.subr.mxu0 0.0
    %253 = vmatpush1.msra.mxu0 0.0
    %254 = vmatprep.subr.mxu0 0.0
    %255 = vmatpush1.msra.mxu0 0.0
    %256 = vmatprep.subr.mxu0 0.0
    %257 = vmatpush1.msra.mxu0 0.0
    %258 = vmatprep.subr.mxu0 0.0
    %259 = vmatpush1.msra.mxu0 0.0
    %260 = vmatprep.subr.mxu0 0.0
    %261 = vmatpush1.msra.mxu0 0.0
    %262 = vmatprep.subr.mxu0 0.0
    %263 = vmatpush1.msra.mxu0 0.0
    %264 = vmatprep.subr.mxu0 0.0
    %265 = vmatpush1.msra.mxu0 0.0
    %266 = vmatprep.subr.mxu0 0.0
    %267 = vmatpush1.msra.mxu0 %v217
    %268 = vmatprep.subr.mxu0 0.0
    %269 = vmatpush1.msra.mxu0 %v216
    %270 = vmatprep.subr.mxu0 0.0
    %271 = vmatpush1.msra.mxu0 %v215
    %272 = vmatprep.subr.mxu0 0.0
    %273 = vmatpush1.msra.mxu0 %v214
    %274 = vmatprep.subr.mxu0 0.0
    %275 = vmatpush2.msra.mxu0 0.0
    %276 = vmatprep.subr.mxu0 0.0
    %277 = vmatpush2.msra.mxu0 0.0
    %278 = vmatprep.subr.mxu0 0.0
    %279 = vmatpush2.msra.mxu0 0.0
    %280 = vmatprep.subr.mxu0 0.0
    %281 = vmatpush2.msra.mxu0 0.0
    %282 = vmatprep.subr.mxu0 0.0
    %283 = vmatpush2.msra.mxu0 0.0
    %284 = vmatprep.subr.mxu0 0.0
    %285 = vmatpush2.msra.mxu0 0.0
    %286 = vmatprep.subr.mxu0 0.0
    %287 = vmatpush2.msra.mxu0 0.0
    %288 = vmatprep.subr.mxu0 0.0
    %289 = vmatpush2.msra.mxu0 0.0
    %290 = vmatprep.subr.mxu0 0.0
    %291 = vmatpush2.msra.mxu0 0.0
    %292 = vmatprep.subr.mxu0 0.0
    %293 = vmatpush2.msra.mxu0 0.0
    %294 = vmatprep.subr.mxu0 0.0
    %295 = vmatpush2.msra.mxu0 0.0
    %296 = vmatprep.subr.mxu0 0.0
    %297 = vmatpush2.msra.mxu0 0.0
    %298 = vmatprep.subr.mxu0 0.0
    %299 = vmatpush2.msra.mxu0 0.0
    %300 = vmatprep.subr.mxu0 0.0
    %301 = vmatpush2.msra.mxu0 0.0
    %302 = vmatprep.subr.mxu0 0.0
    %303 = vmatpush2.msra.mxu0 0.0
    %304 = vmatprep.subr.mxu0 0.0
    %305 = vmatpush2.msra.mxu0 0.0
    %306 = vmatprep.mubr.f32.mxu0 0.0
    %307 = vmatmul.mubr.f32.gmra.mxu0 %v219
    %v308 = vpop.f32.mrf.mxu0
    %v309 = vadd.f32 0.0, %v308
    %v310 = vpop.f32.mrf.mxu0
    %311 = vmatprep.mubr.f32.mxu0 0.0
    %312 = vmatmul.mubr.f32.gmra.mxu0 %v222
    %v313 = vpop.f32.mrf.mxu0
    %v314 = vadd.f32 0.0, %v313
    %v315 = vpop.f32.mrf.mxu0
    %316 = vmatprep.mubr.f32.mxu0 0.0
    %317 = vmatmul.mubr.f32.gmra.mxu0 %v225
    %v318 = vpop.f32.mrf.mxu0
    %v319 = vadd.f32 0.0, %v318
    %v320 = vpop.f32.mrf.mxu0
    %321 = vmatprep.mubr.f32.mxu0 0.0
    %322 = vmatmul.mubr.f32.gmra.mxu0 %v228
    %v323 = vpop.f32.mrf.mxu0
    %v324 = vadd.f32 0.0, %v323
    %v325 = vpop.f32.mrf.mxu0
    %326 = vmatprep.mubr.f32.mxu0 0.0
    %327 = vmatmul.mubr.f32.gmra.mxu0 %v231
    %v328 = vpop.f32.mrf.mxu0
    %v329 = vadd.f32 0.0, %v328
    %v330 = vpop.f32.mrf.mxu0
    %331 = vmatprep.mubr.f32.mxu0 0.0
    %332 = vmatmul.mubr.f32.gmra.mxu0 %v234
    %v333 = vpop.f32.mrf.mxu0
    %v334 = vadd.f32 0.0, %v333
    %v335 = vpop.f32.mrf.mxu0
    %336 = vmatprep.mubr.f32.mxu0 0.0
    %337 = vmatmul.mubr.f32.gmra.mxu0 %v237
    %v338 = vpop.f32.mrf.mxu0
    %v339 = vadd.f32 0.0, %v338
    %v340 = vpop.f32.mrf.mxu0
    %341 = vmatprep.mubr.f32.mxu0 0.0
    %342 = vmatmul.mubr.f32.gmra.mxu0 %v240
    %v343 = vpop.f32.mrf.mxu0
    %v344 = vadd.f32 0.0, %v343
    %v345 = vpop.f32.mrf.mxu0
    %346 = vdwg.mxu0
    %v347 = vld [vmem:[%s7] sm:$0x1]
    %v349 = vlaneseq
    %v350 = vshrl.u32 %v349, 7
    %v351 = vsub.s32 0, %v350
    %v352 = vrot.slane %v347, %v351
    %v354 = vadd.f32 %v309, %v352
    %v355 = vadd.f32 %v314, %v352
    %v356 = vadd.f32 %v319, %v352
    %v357 = vadd.f32 %v324, %v352
    %v358 = vadd.f32 %v329, %v352
    %v359 = vadd.f32 %v334, %v352
    %v360 = vadd.f32 %v339, %v352
    %v361 = vadd.f32 %v344, %v352
    %v363 = vcombine.high %v211, %v211
    %v365 = vunpack.c.l.s4 1966171168
    %v366 = vunpack.c.0.s8 %v365
    %v367 = vlaneseq
    %v368 = vshrl.u32 %v367, 7
    %v369 = vsub.s32 %v366, %v368
    %v370 = vrot.slane %v211, %v369
    %v372 = vunpack.c.l.s4 1966171168
    %v373 = vunpack.c.0.s8 %v372
    %v374 = vlaneseq
    %v375 = vshrl.u32 %v374, 7
    %v376 = vsub.s32 %v373, %v375
    %v377 = vrot.slane %v363, %v376
    %v378 = vcombine.high %v370, %v370
    %v379 = vcombine.high %v377, %v377
    %v381 = vunpack.c.l.s4 1966171168
    %v382 = vunpack.c.0.s8 %v381
    %v383 = vlaneseq
    %v384 = vshrl.u32 %v383, 7
    %v385 = vsub.s32 %v382, %v384
    %v386 = vrot.slane %v370, %v385
    %v388 = vunpack.c.l.s4 1966171168
    %v389 = vunpack.c.0.s8 %v388
    %v390 = vlaneseq
    %v391 = vshrl.u32 %v390, 7
    %v392 = vsub.s32 %v389, %v391
    %v393 = vrot.slane %v377, %v392
    %v395 = vunpack.c.l.s4 1966171168
    %v396 = vunpack.c.0.s8 %v395
    %v397 = vlaneseq
    %v398 = vshrl.u32 %v397, 7
    %v399 = vsub.s32 %v396, %v398
    %v400 = vrot.slane %v378, %v399
    %v402 = vunpack.c.l.s4 1966171168
    %v403 = vunpack.c.0.s8 %v402
    %v404 = vlaneseq
    %v405 = vshrl.u32 %v404, 7
    %v406 = vsub.s32 %v403, %v405
    %v407 = vrot.slane %v379, %v406
    %v408 = vcombine.high %v386, %v386
    %v409 = vcombine.high %v393, %v393
    %v410 = vcombine.high %v400, %v400
    %v411 = vcombine.high %v407, %v407
    %v412 = vlaneseq
    %v413 = vshrl.u32 %v412, 7
    %v414 = vsub.s32 0, %v413
    %v415 = vrot.slane %v386, %v414
    %v416 = vlaneseq
    %v417 = vshrl.u32 %v416, 7
    %v418 = vsub.s32 0, %v417
    %v419 = vrot.slane %v400, %v418
    %v420 = vlaneseq
    %v421 = vshrl.u32 %v420, 7
    %v422 = vsub.s32 0, %v421
    %v423 = vrot.slane %v408, %v422
    %v424 = vlaneseq
    %v425 = vshrl.u32 %v424, 7
    %v426 = vsub.s32 0, %v425
    %v427 = vrot.slane %v410, %v426
    %v428 = vlaneseq
    %v429 = vshrl.u32 %v428, 7
    %v430 = vsub.s32 0, %v429
    %v431 = vrot.slane %v393, %v430
    %v432 = vlaneseq
    %v433 = vshrl.u32 %v432, 7
    %v434 = vsub.s32 0, %v433
    %v435 = vrot.slane %v407, %v434
    %v436 = vlaneseq
    %v437 = vshrl.u32 %v436, 7
    %v438 = vsub.s32 0, %v437
    %v439 = vrot.slane %v409, %v438
    %v440 = vlaneseq
    %v441 = vshrl.u32 %v440, 7
    %v442 = vsub.s32 0, %v441
    %v443 = vrot.slane %v411, %v442
    %v452 = vadd.f32 %v415, %v354
    %v453 = vadd.f32 %v419, %v355
    %v454 = vadd.f32 %v423, %v356
    %v455 = vadd.f32 %v427, %v357
    %v456 = vadd.f32 %v431, %v358
    %v457 = vadd.f32 %v435, %v359
    %v458 = vadd.f32 %v439, %v360
    %v459 = vadd.f32 %v443, %v361
    %v460 = vtanh.pop %v452
    %v461 = vtanh.pop %v453
    %v462 = vtanh.pop %v454
    %v463 = vtanh.pop %v455
    %v464 = vtanh.pop %v456
    %v465 = vtanh.pop %v457
    %v466 = vtanh.pop %v458
    %v467 = vtanh.pop %v459
    %v468 = vld [vmem:[%s8] sm:$0x1]
    %v470 = vlaneseq
    %v471 = vshrl.u32 %v470, 7
    %v472 = vsub.s32 0, %v471
    %v473 = vrot.slane %v468, %v472
    %v475 = vmul.f32 %v460, %v473
    %v476 = vmul.f32 %v461, %v473
    %v477 = vmul.f32 %v462, %v473
    %v478 = vmul.f32 %v463, %v473
    %v479 = vmul.f32 %v464, %v473
    %v480 = vmul.f32 %v465, %v473
    %v481 = vmul.f32 %v466, %v473
    %v482 = vmul.f32 %v467, %v473
    %483 = vadd.xlane.f32.xlu0 %v475
    %v484 = vpop.xlane.xlu0 %483
    %485 = vadd.xlane.f32.xlu0 %v476
    %v486 = vpop.xlane.xlu0 %485
    %487 = vadd.xlane.f32.xlu0 %v477
    %v488 = vpop.xlane.xlu0 %487
    %489 = vadd.xlane.f32.xlu0 %v478
    %v490 = vpop.xlane.xlu0 %489
    %491 = vadd.xlane.f32.xlu0 %v479
    %v492 = vpop.xlane.xlu0 %491
    %493 = vadd.xlane.f32.xlu0 %v480
    %v494 = vpop.xlane.xlu0 %493
    %495 = vadd.xlane.f32.xlu0 %v481
    %v496 = vpop.xlane.xlu0 %495
    %497 = vadd.xlane.f32.xlu0 %v482
    %v498 = vpop.xlane.xlu0 %497
    %vm499 = vcmp.eq.f32.partialorder %v128, 0.0
    %v508 = vlaneseq
    %v509 = vand.u32 %v508, 127
    %v510 = vlaneseq
    %v511 = vshrl.u32 %v510, 7
    %v512 = vsub.s32 %v509, %v511
    %v513 = vrot.slane %v484, %v512
    %v514 = vlaneseq
    %v515 = vshrl.u32 %v514, 7
    %v516 = vsub.s32 %v509, %v515
    %v517 = vrot.slane %v486, %v516
    %v518 = vlaneseq
    %v519 = vshrl.u32 %v518, 7
    %v520 = vsub.s32 %v509, %v519
    %v521 = vrot.slane %v488, %v520
    %v522 = vlaneseq
    %v523 = vshrl.u32 %v522, 7
    %v524 = vsub.s32 %v509, %v523
    %v525 = vrot.slane %v490, %v524
    %v526 = vlaneseq
    %v527 = vshrl.u32 %v526, 7
    %v528 = vsub.s32 %v509, %v527
    %v529 = vrot.slane %v492, %v528
    %v530 = vlaneseq
    %v531 = vshrl.u32 %v530, 7
    %v532 = vsub.s32 %v509, %v531
    %v533 = vrot.slane %v494, %v532
    %v534 = vlaneseq
    %v535 = vshrl.u32 %v534, 7
    %v536 = vsub.s32 %v509, %v535
    %v537 = vrot.slane %v496, %v536
    %v538 = vlaneseq
    %v539 = vshrl.u32 %v538, 7
    %v540 = vsub.s32 %v509, %v539
    %v541 = vrot.slane %v498, %v540
    %vm542 = vcmask 1041409
    %v543 = vsel %vm542, %v517, %v513
    %vm544 = vcmask 1042434
    %v545 = vsel %vm544, %v521, %v543
    %vm546 = vcmask 1043459
    %v547 = vsel %vm546, %v525, %v545
    %vm548 = vcmask 1044484
    %v549 = vsel %vm548, %v529, %v547
    %vm550 = vcmask 1045509
    %v551 = vsel %vm550, %v533, %v549
    %vm552 = vcmask 1046534
    %v553 = vsel %vm552, %v537, %v551
    %vm554 = vcmask 1047559
    %v555 = vsel %vm554, %v541, %v553
    %v557 = vsel %vm499, -1e+09, %v555
    %vm558 = vcmask 64512
    %v559 = vsel %vm558, %v557, -inf
    %560 = vmax.xlane.f32.xlu0 %v559
    %v561 = vpop.xlane.xlu0 %560
    %v562 = vsub.f32 %v557, %v561
    %v563 = vmul.f32 %v562, 1.442695
    %v564 = vpow.pop %v563
    %v565 = vsel %vm558, %v564, 0.0
    %566 = vadd.xlane.f32.xlu0 %v565
    %v567 = vpop.xlane.xlu0 %566
    %v568 = vrcp.pop %v567
    %v569 = vmul.f32 %v564, %v568
    %v570 = vlaneseq
    %v571 = vshrl.u32 %v570, 7
    %v572 = vsub.s32 0, %v571
    %v573 = vrot.slane %v569, %v572
    %575 = vbcast.lane.b32.xlu0 %v573, 256
    %v576 = vpop.permute.xlu0 %575
    %v577 = vlaneseq
    %v578 = vshrl.u32 %v577, 7
    %v579 = vsub.s32 1, %v578
    %v580 = vrot.slane %v569, %v579
    %582 = vbcast.lane.b32.xlu0 %v580, 256
    %v583 = vpop.permute.xlu0 %582
    %v584 = vlaneseq
    %v585 = vshrl.u32 %v584, 7
    %v586 = vsub.s32 2, %v585
    %v587 = vrot.slane %v569, %v586
    %589 = vbcast.lane.b32.xlu0 %v587, 256
    %v590 = vpop.permute.xlu0 %589
    %v591 = vlaneseq
    %v592 = vshrl.u32 %v591, 7
    %v593 = vsub.s32 3, %v592
    %v594 = vrot.slane %v569, %v593
    %596 = vbcast.lane.b32.xlu0 %v594, 256
    %v597 = vpop.permute.xlu0 %596
    %v598 = vlaneseq
    %v599 = vshrl.u32 %v598, 7
    %v600 = vsub.s32 4, %v599
    %v601 = vrot.slane %v569, %v600
    %603 = vbcast.lane.b32.xlu0 %v601, 256
    %v604 = vpop.permute.xlu0 %603
    %v605 = vlaneseq
    %v606 = vshrl.u32 %v605, 7
    %v607 = vsub.s32 5, %v606
    %v608 = vrot.slane %v569, %v607
    %610 = vbcast.lane.b32.xlu0 %v608, 256
    %v611 = vpop.permute.xlu0 %610
    %v612 = vlaneseq
    %v613 = vshrl.u32 %v612, 7
    %v614 = vsub.s32 6, %v613
    %v615 = vrot.slane %v569, %v614
    %617 = vbcast.lane.b32.xlu0 %v615, 256
    %v618 = vpop.permute.xlu0 %617
    %v619 = vlaneseq
    %v620 = vshrl.u32 %v619, 7
    %v621 = vsub.s32 7, %v620
    %v622 = vrot.slane %v569, %v621
    %624 = vbcast.lane.b32.xlu0 %v622, 256
    %v625 = vpop.permute.xlu0 %624
    %v626 = vmul.f32 %v576, %v120
    %v627 = vmul.f32 %v583, %v121
    %v628 = vmul.f32 %v590, %v122
    %v629 = vmul.f32 %v597, %v123
    %v630 = vmul.f32 %v604, %v124
    %v631 = vmul.f32 %v611, %v125
    %v632 = vmul.f32 %v618, %v126
    %v633 = vmul.f32 %v625, %v127
    %v634 = vsel %vm140, %v626, 0.0
    %v635 = vrot.slane %v634, 4
    %v636 = vadd.f32 %v634, %v635
    %v637 = vrot.slane %v636, 2
    %v638 = vadd.f32 %v636, %v637
    %v639 = vrot.slane %v638, 1
    %v640 = vadd.f32 %v638, %v639
    %v641 = vsel %vm140, %v627, 0.0
    %v642 = vrot.slane %v641, 4
    %v643 = vadd.f32 %v641, %v642
    %v644 = vrot.slane %v643, 2
    %v645 = vadd.f32 %v643, %v644
    %v646 = vrot.slane %v645, 1
    %v647 = vadd.f32 %v645, %v646
    %v648 = vsel %vm140, %v628, 0.0
    %v649 = vrot.slane %v648, 4
    %v650 = vadd.f32 %v648, %v649
    %v651 = vrot.slane %v650, 2
    %v652 = vadd.f32 %v650, %v651
    %v653 = vrot.slane %v652, 1
    %v654 = vadd.f32 %v652, %v653
    %v655 = vsel %vm140, %v629, 0.0
    %v656 = vrot.slane %v655, 4
    %v657 = vadd.f32 %v655, %v656
    %v658 = vrot.slane %v657, 2
    %v659 = vadd.f32 %v657, %v658
    %v660 = vrot.slane %v659, 1
    %v661 = vadd.f32 %v659, %v660
    %v662 = vsel %vm140, %v630, 0.0
    %v663 = vrot.slane %v662, 4
    %v664 = vadd.f32 %v662, %v663
    %v665 = vrot.slane %v664, 2
    %v666 = vadd.f32 %v664, %v665
    %v667 = vrot.slane %v666, 1
    %v668 = vadd.f32 %v666, %v667
    %v669 = vsel %vm140, %v631, 0.0
    %v670 = vrot.slane %v669, 4
    %v671 = vadd.f32 %v669, %v670
    %v672 = vrot.slane %v671, 2
    %v673 = vadd.f32 %v671, %v672
    %v674 = vrot.slane %v673, 1
    %v675 = vadd.f32 %v673, %v674
    %v676 = vsel %vm140, %v632, 0.0
    %v677 = vrot.slane %v676, 4
    %v678 = vadd.f32 %v676, %v677
    %v679 = vrot.slane %v678, 2
    %v680 = vadd.f32 %v678, %v679
    %v681 = vrot.slane %v680, 1
    %v682 = vadd.f32 %v680, %v681
    %v683 = vsel %vm140, %v633, 0.0
    %v684 = vrot.slane %v683, 4
    %v685 = vadd.f32 %v683, %v684
    %v686 = vrot.slane %v685, 2
    %v687 = vadd.f32 %v685, %v686
    %v688 = vrot.slane %v687, 1
    %v689 = vadd.f32 %v687, %v688
    %v698 = vsel %vm542, %v647, %v640
    %v699 = vsel %vm544, %v654, %v698
    %v700 = vsel %vm546, %v661, %v699
    %v701 = vsel %vm548, %v668, %v700
    %v702 = vsel %vm550, %v675, %v701
    %v703 = vsel %vm552, %v682, %v702
    %v704 = vsel %vm554, %v689, %v703
    %706 = vst.msk [vmem:[#allocation13] sm:$0xff] %vm140, %v704
    // Predicated region
    $region62: #{tpu_custom_call.1} parent=1 // pred_check
      _
    $region63: #{tpu_custom_call.1} parent=1 // pred_check_branch
      %708 = sbr.rel (0) target = $region65
    $region64: #{tpu_custom_call.1} parent=1 // pred_region
      %s710 = ssub.s32 128, 128
      %711 = vsyncadd [#allocation4], %s710
      %s713 = sshll.u32 [#allocation13], 4
      %s714 = int_to_ptr.vmem [resolvable:$true] %s713
      %716 = dma.vmem_to_hbm [thread:$0]  %s714, 128, %s9, [#allocation4]
    $region65: #{tpu_custom_call.1} parent=1 // pred_fallthru
      _
    // Predicated region
    $region66: #{tpu_custom_call.1} parent=1 // pred_check
      _
    $region67: #{tpu_custom_call.1} parent=1 // pred_check_branch
      %718 = sbr.rel (0) target = $region69
    $region68: #{tpu_custom_call.1} parent=1 // pred_region
      %719 = dma.done [#allocation4], 128
    $region69: #{tpu_custom_call.1} parent=1 // pred_fallthru
      _
    %720 = vsyncpa [#allocation3], 1
    %721 = vsyncpa [#allocation6], 1
    %722 = vsyncpa [#allocation9], 1
    %723 = vsyncpa [#allocation12], 1
    %724 = vsyncpa [#allocation4], 1

</llo_original>
